<compile_context>
chip_gen: v6e
topology: v6e:2x2x1
jax: 0.10.0
libtpu: 0.0.40
codegen_flags: <defaults>
</compile_context>

<pallas_src>
import jax
import jax.numpy as jnp
from jax.experimental import pallas as pl
from jax.experimental.pallas import tpu as pltpu

BN_EPS = 1e-5
LANE = 128


def mlp_kernel(x_ref, w1_ref, b1_ref, w2_ref, b2_ref, w3_ref, b3_ref, out_ref):
    """Fused BN-folded 3-layer MLP on one batch tile: (matmul+bias+ReLU) x2, matmul+bias."""
    h = jnp.dot(x_ref[...], w1_ref[...], preferred_element_type=jnp.float32)
    h = jnp.maximum(h + b1_ref[...], 0.0)
    h = jnp.dot(h, w2_ref[...], preferred_element_type=jnp.float32)
    h = jnp.maximum(h + b2_ref[...], 0.0)
    h = jnp.dot(h, w3_ref[...], preferred_element_type=jnp.float32) + b3_ref[...]
    out_ref[...] = h.astype(out_ref.dtype)


def weight_norm(v, g):
    """PyTorch nn.utils.weight_norm (dim=0): W[i,:] = g[i] * V[i,:] / ||V[i,:]||."""
    norm = jnp.sqrt(jnp.sum(v * v, axis=1, keepdims=True))
    return g * v / norm


def make_raw_params(key, num_features, num_targets, hidden_size):
    """Deterministic synthetic parameters matching the PyTorch module's shapes.

    Returns the 'raw' (un-folded) parameter tuple:
      (gamma, beta, mean, var) per BN  -- each (1, dim)
      effective weight (in, out)       -- weight_norm already applied, transposed
      bias (1, out)
    """
    ks = jax.random.split(key, 12)
    f32 = jnp.float32

    def lin(kw, kb, kg, out_dim, in_dim):
        # PyTorch Linear weight is (out, in); weight_norm g is (out, 1).
        v = jax.random.normal(kw, (out_dim, in_dim), f32) * 0.1
        b = jax.random.normal(kb, (out_dim,), f32) * 0.05
        g = 1.0 + 0.1 * jax.random.normal(kg, (out_dim, 1), f32)
        w = weight_norm(v, g)          # effective weight (out, in)
        return w.T, b.reshape(1, -1)   # transposed (in, out) for x @ W

    def bn(kg, kb, km, kv, dim):
        gamma = 1.0 + 0.1 * jax.random.normal(kg, (dim,), f32)
        beta = 0.1 * jax.random.normal(kb, (dim,), f32)
        mean = 0.1 * jax.random.normal(km, (dim,), f32)
        var = 1.0 + 0.1 * jax.random.uniform(kv, (dim,), f32)
        return (gamma.reshape(1, -1), beta.reshape(1, -1),
                mean.reshape(1, -1), var.reshape(1, -1))

    bn1 = bn(ks[0], ks[1], ks[2], ks[3], num_features)
    w1, b1 = lin(ks[4], ks[5], ks[6], hidden_size, num_features)
    bn2 = bn(ks[7], ks[8], ks[9], ks[10], hidden_size)
    w2, b2 = lin(ks[11], ks[0], ks[1], hidden_size, hidden_size)
    bn3 = bn(ks[2], ks[3], ks[4], ks[5], hidden_size)
    w3, b3 = lin(ks[6], ks[7], ks[8], num_targets, hidden_size)

    return (*bn1, w1, b1, *bn2, w2, b2, *bn3, w3, b3)


def fold_params(raw):
    """Fold BN (running-stats affine) + dropout(identity) into each Linear.

    BN(x) = x * s + t  with  s = gamma * rsqrt(var+eps),  t = beta - mean * s.
    BN(x) @ W + b = x @ (diag(s) @ W) + (t @ W + b).
    The final layer is zero-padded to a multiple of 128 output lanes.
    """
    (g1, be1, m1, v1, w1, bb1,
     g2, be2, m2, v2, w2, bb2,
     g3, be3, m3, v3, w3, bb3) = raw

    def fold(gamma, beta, mean, var, w, b):
        scale = gamma * jax.lax.rsqrt(var + BN_EPS)   # (1, in)
        shift = beta - mean * scale                    # (1, in)
        w_f = w * scale.reshape(-1, 1)                 # (in, out)
        b_f = b + shift @ w                            # (1, out)
        return w_f, b_f

    w1f, b1f = fold(g1, be1, m1, v1, w1, bb1)
    w2f, b2f = fold(g2, be2, m2, v2, w2, bb2)
    w3f, b3f = fold(g3, be3, m3, v3, w3, bb3)

    num_targets = w3f.shape[1]
    t_pad = ((num_targets + LANE - 1) // LANE) * LANE
    if t_pad != num_targets:
        w3f = jnp.pad(w3f, ((0, 0), (0, t_pad - num_targets)))
        b3f = jnp.pad(b3f, ((0, 0), (0, t_pad - num_targets)))

    return (w1f, b1f, w2f, b2f, w3f, b3f), num_targets


def _round_up(n, m):
    return ((n + m - 1) // m) * m


def model_forward(x, folded_params, num_targets, block_batch=512):
    w1, b1, w2, b2, w3, b3 = folded_params
    batch, nf = x.shape
    hidden = w1.shape[1]
    t_pad = w3.shape[1]

    # Batch tile: as large as practical (only free MXU lever at these K/N);
    # pad batch so it divides evenly into sublane-aligned tiles.
    tb = min(block_batch, _round_up(batch, 8))
    b_pad = _round_up(batch, tb)
    if b_pad != batch:
        x = jnp.pad(x, ((0, b_pad - batch), (0, 0)))

    const = lambda i: (0, 0)   # weights/biases stay resident across grid steps
    out = pl.pallas_call(
        mlp_kernel,
        out_shape=jax.ShapeDtypeStruct((b_pad, t_pad), jnp.float32),
        grid=(b_pad // tb,),
        in_specs=[
            pl.BlockSpec((tb, nf), lambda i: (i, 0)),
            pl.BlockSpec((nf, hidden), const),
            pl.BlockSpec((1, hidden), const),
            pl.BlockSpec((hidden, hidden), const),
            pl.BlockSpec((1, hidden), const),
            pl.BlockSpec((hidden, t_pad), const),
            pl.BlockSpec((1, t_pad), const),
        ],
        out_specs=pl.BlockSpec((tb, t_pad), lambda i: (i, 0)),
        compiler_params=pltpu.CompilerParams(
            dimension_semantics=("parallel",)),
    )(x, w1, b1, w2, b2, w3, b3)

    return out[:batch, :num_targets]


def reference_forward(x, raw_params):
    """Pure-JAX reference on the UN-folded params (validates BN folding too)."""
    (g1, be1, m1, v1, w1, bb1,
     g2, be2, m2, v2, w2, bb2,
     g3, be3, m3, v3, w3, bb3) = raw_params
    h = (x - m1) * jax.lax.rsqrt(v1 + BN_EPS) * g1 + be1
    h = jnp.maximum(h @ w1 + bb1, 0.0)
    h = (h - m2) * jax.lax.rsqrt(v2 + BN_EPS) * g2 + be2
    h = jnp.maximum(h @ w2 + bb2, 0.0)
    h = (h - m3) * jax.lax.rsqrt(v3 + BN_EPS) * g3 + be3
    return h @ w3 + bb3


if __name__ == "__main__":
    num_features = 16
    num_targets = 8
    hidden_size = 32
    batch = 64

    key = jax.random.PRNGKey(0)
    kx, kp = jax.random.split(key)
    x = jax.random.normal(kx, (batch, num_features), jnp.float32)

    raw_params = make_raw_params(kp, num_features, num_targets, hidden_size)
    folded_params, _ = fold_params(raw_params)

    # block_batch=32 so the small test exercises a multi-step grid (64/32 = 2).
    out = model_forward(x, folded_params, num_targets, block_batch=32)
    jax.block_until_ready(out)

    ref = reference_forward(x, raw_params)
    assert out.shape == (batch, num_targets)
    assert jnp.allclose(out, ref, atol=1e-4, rtol=1e-4)

    print("KERNEL_OK")
</pallas_src>

<mosaic_0001>
module attributes {stable_mosaic.version = 11 : i64} {
  func.func @mlp_kernel(%arg0: i32, %arg1: memref<32x16xf32, #tpu.memory_space<vmem>>, %arg2: memref<16x32xf32, #tpu.memory_space<vmem>>, %arg3: memref<1x32xf32, #tpu.memory_space<vmem>>, %arg4: memref<32x32xf32, #tpu.memory_space<vmem>>, %arg5: memref<1x32xf32, #tpu.memory_space<vmem>>, %arg6: memref<32x128xf32, #tpu.memory_space<vmem>>, %arg7: memref<1x128xf32, #tpu.memory_space<vmem>>, %arg8: memref<32x128xf32, #tpu.memory_space<vmem>>) attributes {dimension_semantics = [#tpu.dimension_semantics<parallel>], iteration_bounds = array<i64: 2>, scalar_prefetch = 0 : i64, scratch_operands = 0 : i64, tpu.core_type = #tpu.core_type<tc>, window_params = [{transform_indices = @transform_0, window_bounds = array<i64: 32, 16>}, {pipeline_mode = #tpu.pipeline_mode<synchronous>, transform_indices = @transform_1, window_bounds = array<i64: 16, 32>}, {pipeline_mode = #tpu.pipeline_mode<synchronous>, transform_indices = @transform_2, window_bounds = array<i64: 1, 32>}, {pipeline_mode = #tpu.pipeline_mode<synchronous>, transform_indices = @transform_3, window_bounds = array<i64: 32, 32>}, {pipeline_mode = #tpu.pipeline_mode<synchronous>, transform_indices = @transform_4, window_bounds = array<i64: 1, 32>}, {pipeline_mode = #tpu.pipeline_mode<synchronous>, transform_indices = @transform_5, window_bounds = array<i64: 32, 128>}, {pipeline_mode = #tpu.pipeline_mode<synchronous>, transform_indices = @transform_6, window_bounds = array<i64: 1, 128>}, {transform_indices = @transform_7, window_bounds = array<i64: 32, 128>}]} {
    %c0 = arith.constant 0 : index
    %c0_0 = arith.constant 0 : index
    %0 = vector.load %arg1[%c0, %c0_0] : memref<32x16xf32, #tpu.memory_space<vmem>>, vector<32x16xf32>
    %c0_1 = arith.constant 0 : index
    %c0_2 = arith.constant 0 : index
    %1 = vector.load %arg2[%c0_1, %c0_2] : memref<16x32xf32, #tpu.memory_space<vmem>>, vector<16x32xf32>
    %cst = arith.constant dense<0.000000e+00> : vector<32x32xf32>
    %2 = tpu.matmul %0, %1, %cst {dimension_numbers = #tpu.dot_dimension_numbers<[1], [0], [0], [1], [0, 0, 1, 1], [], []>} : vector<32x16xf32>, vector<16x32xf32>, vector<32x32xf32> -> vector<32x32xf32>
    %c0_3 = arith.constant 0 : index
    %c0_4 = arith.constant 0 : index
    %3 = vector.load %arg3[%c0_3, %c0_4] : memref<1x32xf32, #tpu.memory_space<vmem>>, vector<1x32xf32>
    %4 = vector.broadcast %3 : vector<1x32xf32> to vector<32x32xf32>
    %5 = arith.addf %2, %4 : vector<32x32xf32>
    %cst_5 = arith.constant 0.000000e+00 : f32
    %6 = vector.broadcast %cst_5 : f32 to vector<32x32xf32>
    %7 = arith.maximumf %5, %6 : vector<32x32xf32>
    %c0_6 = arith.constant 0 : index
    %c0_7 = arith.constant 0 : index
    %8 = vector.load %arg4[%c0_6, %c0_7] : memref<32x32xf32, #tpu.memory_space<vmem>>, vector<32x32xf32>
    %cst_8 = arith.constant dense<0.000000e+00> : vector<32x32xf32>
    %9 = tpu.matmul %7, %8, %cst_8 {dimension_numbers = #tpu.dot_dimension_numbers<[1], [0], [0], [1], [0, 0, 1, 1], [], []>} : vector<32x32xf32>, vector<32x32xf32>, vector<32x32xf32> -> vector<32x32xf32>
    %c0_9 = arith.constant 0 : index
    %c0_10 = arith.constant 0 : index
    %10 = vector.load %arg5[%c0_9, %c0_10] : memref<1x32xf32, #tpu.memory_space<vmem>>, vector<1x32xf32>
    %11 = vector.broadcast %10 : vector<1x32xf32> to vector<32x32xf32>
    %12 = arith.addf %9, %11 : vector<32x32xf32>
    %cst_11 = arith.constant 0.000000e+00 : f32
    %13 = vector.broadcast %cst_11 : f32 to vector<32x32xf32>
    %14 = arith.maximumf %12, %13 : vector<32x32xf32>
    %c0_12 = arith.constant 0 : index
    %c0_13 = arith.constant 0 : index
    %15 = vector.load %arg6[%c0_12, %c0_13] : memref<32x128xf32, #tpu.memory_space<vmem>>, vector<32x128xf32>
    %cst_14 = arith.constant dense<0.000000e+00> : vector<32x128xf32>
    %16 = tpu.matmul %14, %15, %cst_14 {dimension_numbers = #tpu.dot_dimension_numbers<[1], [0], [0], [1], [0, 0, 1, 1], [], []>} : vector<32x32xf32>, vector<32x128xf32>, vector<32x128xf32> -> vector<32x128xf32>
    %c0_15 = arith.constant 0 : index
    %c0_16 = arith.constant 0 : index
    %17 = vector.load %arg7[%c0_15, %c0_16] : memref<1x128xf32, #tpu.memory_space<vmem>>, vector<1x128xf32>
    %18 = vector.broadcast %17 : vector<1x128xf32> to vector<32x128xf32>
    %19 = arith.addf %16, %18 : vector<32x128xf32>
    %c0_17 = arith.constant 0 : index
    %c0_18 = arith.constant 0 : index
    %20 = vector.load %arg8[%c0_17, %c0_18] : memref<32x128xf32, #tpu.memory_space<vmem>>, vector<32x128xf32>
    tpu.vector_store %arg8[%c0_17, %c0_18], %19 {strides = array<i32>} : memref<32x128xf32, #tpu.memory_space<vmem>>, vector<32x128xf32>,
    return
  }
  func.func @transform_0(%arg0: i32) -> (i32, i32) {
    %c0_i32 = arith.constant 0 : i32
    %c0_i32_0 = arith.constant 0 : i32
    return %arg0, %c0_i32 : i32, i32
  }
  func.func @transform_1(%arg0: i32) -> (i32, i32) {
    %c0_i32 = arith.constant 0 : i32
    %c0_i32_0 = arith.constant 0 : i32
    %c0_i32_1 = arith.constant 0 : i32
    return %c0_i32, %c0_i32_0 : i32, i32
  }
  func.func @transform_2(%arg0: i32) -> (i32, i32) {
    %c0_i32 = arith.constant 0 : i32
    %c0_i32_0 = arith.constant 0 : i32
    %c0_i32_1 = arith.constant 0 : i32
    return %c0_i32, %c0_i32_0 : i32, i32
  }
  func.func @transform_3(%arg0: i32) -> (i32, i32) {
    %c0_i32 = arith.constant 0 : i32
    %c0_i32_0 = arith.constant 0 : i32
    %c0_i32_1 = arith.constant 0 : i32
    return %c0_i32, %c0_i32_0 : i32, i32
  }
  func.func @transform_4(%arg0: i32) -> (i32, i32) {
    %c0_i32 = arith.constant 0 : i32
    %c0_i32_0 = arith.constant 0 : i32
    %c0_i32_1 = arith.constant 0 : i32
    return %c0_i32, %c0_i32_0 : i32, i32
  }
  func.func @transform_5(%arg0: i32) -> (i32, i32) {
    %c0_i32 = arith.constant 0 : i32
    %c0_i32_0 = arith.constant 0 : i32
    %c0_i32_1 = arith.constant 0 : i32
    return %c0_i32, %c0_i32_0 : i32, i32
  }
  func.func @transform_6(%arg0: i32) -> (i32, i32) {
    %c0_i32 = arith.constant 0 : i32
    %c0_i32_0 = arith.constant 0 : i32
    %c0_i32_1 = arith.constant 0 : i32
    return %c0_i32, %c0_i32_0 : i32, i32
  }
  func.func @transform_7(%arg0: i32) -> (i32, i32) {
    %c0_i32 = arith.constant 0 : i32
    %c0_i32_0 = arith.constant 0 : i32
    return %arg0, %c0_i32 : i32, i32
  }
}

</mosaic_0001>

<llo_original>
// kernel: tpu_custom_call.1
$region0: #{tpu_custom_call.1}
  #allocation0 [shape = 'u32[]', space=smem, size = 0x4, offset = 0x4, fixed_abs, tag = 'smem constant byte address 0x4 - core index']
  #allocation1 [shape = 'u32[144,128]{1,0:T(1,128)}', space=vmem, size = 0x12000, scoped, tag = 'internal scratch']
  %s0 = inlined_call_operand.vmem [shape: f32[64,16], index: 0, kind: input, shape index: {}]
  %s1 = inlined_call_operand.vmem [shape: f32[16,32], index: 1, kind: input, shape index: {}]
  %s2 = inlined_call_operand.vmem [shape: f32[1,32], index: 2, kind: input, shape index: {}]
  %s3 = inlined_call_operand.vmem [shape: f32[32,32], index: 3, kind: input, shape index: {}]
  %s4 = inlined_call_operand.vmem [shape: f32[1,32], index: 4, kind: input, shape index: {}]
  %s5 = inlined_call_operand.vmem [shape: f32[32,128], index: 5, kind: input, shape index: {}]
  %s6 = inlined_call_operand.vmem [shape: f32[1,128], index: 6, kind: input, shape index: {}]
  %s7 = inlined_call_operand.hbm [shape: f32[64,128], index: 7, kind: output, shape index: {}]
  %s8 = sld [smem:[#allocation0]]
  $region61: #{tpu_custom_call.1} parent=0
    _
  %s10 = ssub.s32 1, %s8
  %s11 = scalar_select 0, %s10, %s8
  $region1: #{tpu_custom_call.1} parent=0
    #allocation2 [shape = 'u8[32768]{0}', space=vmem, size = 0x8000, scoped, tag = 'output window, operand 0']
    #allocation3 [shape = 's32[2]{0}', space=sflag, size = 0x8, scoped, tag = 'scoped memory for tpu_custom_call.1']
    %12 = vsyncpa [#allocation3], 0
    %s13 = scalar_lea.sflag [#allocation3], 1
    %14 = vsyncpa %s13, 0
    loop: start=0, step=1, limit=4
    $region2: #{tpu_custom_call.1} parent=1 // loop_pre_header
      _
    $region3: #{tpu_custom_call.1} parent=1 // loop_header
      %s16 = sphi 0, %s20
      %p17 = scmp.ge.s32.totalorder %s16, 4
      %s26 = sphi 0, %s28
      %s29 = sphi 0, %s26
      %s30 = sphi 0, %s29
      %s46 = sphi 0, %s30
      %s50 = sphi 0, %s50
      %s52 = sphi 0, %s50
      %s53 = sphi 0, %s52
      %s67 = sphi 0, %s53
      %s71 = sphi 0, %s71
      %s73 = sphi 0, %s71
      %s74 = sphi 0, %s73
      %s88 = sphi 0, %s74
      %s92 = sphi 0, %s92
      %s94 = sphi 0, %s92
      %s95 = sphi 0, %s94
      %s109 = sphi 0, %s95
      %s113 = sphi 0, %s113
      %s115 = sphi 0, %s113
      %s116 = sphi 0, %s115
      %s130 = sphi 0, %s116
      %s134 = sphi 0, %s134
      %s136 = sphi 0, %s134
      %s137 = sphi 0, %s136
      %s151 = sphi 0, %s137
      %s155 = sphi 0, %s155
      %s157 = sphi 0, %s155
      %s158 = sphi 0, %s157
      %s172 = sphi 0, %s158
      %s178 = sphi 0, %s180
      %s181 = sphi 0, %s178
      %s182 = sphi 0, %s181
      %s198 = sphi 0, %s182
    $region4: #{tpu_custom_call.1} parent=1 // loop_header_branch
      %19 = sbr.rel (%p17) target = $region8
    $region5: #{tpu_custom_call.1} parent=1 // loop_body
      %s21 = ssub.s32 %s16, 1
      %s22 = ssub.s32 %s16, 2
      %s23 = sadd.s32 %s16, 1
      %s24 = ssub.s32 %s16, %s23
      %p25 = scmp.eq.s32.totalorder %s24, 0
      %s27 = sadd.s32 %s26, 1
      %s28 = scalar_select %p25, %s26, %s27
      %p31 = pneg %p25
      %p32 = scmp.eq.s32.totalorder %s16, 1
      %p33 = por %p31, %p32
      %p34 = scmp.ne.s32.totalorder %s26, %s29
      %p35 = scmp.eq.s32.totalorder %s16, 0
      %p36 = por %p34, %p35
      %p37 = scmp.ne.s32.totalorder %s26, %s29
      %p38 = scmp.eq.s32.totalorder %s21, 1
      %p39 = por %p37, %p38
      %p40 = scmp.ne.s32.totalorder %s29, %s30
      %p41 = scmp.eq.s32.totalorder %s21, 0
      %p42 = por %p40, %p41
      %p43 = scmp.ne.s32.totalorder %s29, %s30
      %p44 = scmp.eq.s32.totalorder %s22, 1
      %p45 = por %p43, %p44
      %p47 = scmp.ne.s32.totalorder %s30, %s46
      %p48 = scmp.eq.s32.totalorder %s22, 0
      %p49 = por %p47, %p48
      %s51 = sadd.s32 %s50, 1
      %p54 = scmp.eq.s32.totalorder %s16, 1
      %p55 = scmp.ne.s32.totalorder %s50, %s52
      %p56 = scmp.eq.s32.totalorder %s16, 0
      %p57 = por %p55, %p56
      %p58 = scmp.ne.s32.totalorder %s50, %s52
      %p59 = scmp.eq.s32.totalorder %s21, 1
      %p60 = por %p58, %p59
      %p61 = scmp.ne.s32.totalorder %s52, %s53
      %p62 = scmp.eq.s32.totalorder %s21, 0
      %p63 = por %p61, %p62
      %p64 = scmp.ne.s32.totalorder %s52, %s53
      %p65 = scmp.eq.s32.totalorder %s22, 1
      %p66 = por %p64, %p65
      %p68 = scmp.ne.s32.totalorder %s53, %s67
      %p69 = scmp.eq.s32.totalorder %s22, 0
      %p70 = por %p68, %p69
      %s72 = sadd.s32 %s71, 1
      %p75 = scmp.eq.s32.totalorder %s16, 1
      %p76 = scmp.ne.s32.totalorder %s71, %s73
      %p77 = scmp.eq.s32.totalorder %s16, 0
      %p78 = por %p76, %p77
      %p79 = scmp.ne.s32.totalorder %s71, %s73
      %p80 = scmp.eq.s32.totalorder %s21, 1
      %p81 = por %p79, %p80
      %p82 = scmp.ne.s32.totalorder %s73, %s74
      %p83 = scmp.eq.s32.totalorder %s21, 0
      %p84 = por %p82, %p83
      %p85 = scmp.ne.s32.totalorder %s73, %s74
      %p86 = scmp.eq.s32.totalorder %s22, 1
      %p87 = por %p85, %p86
      %p89 = scmp.ne.s32.totalorder %s74, %s88
      %p90 = scmp.eq.s32.totalorder %s22, 0
      %p91 = por %p89, %p90
      %s93 = sadd.s32 %s92, 1
      %p96 = scmp.eq.s32.totalorder %s16, 1
      %p97 = scmp.ne.s32.totalorder %s92, %s94
      %p98 = scmp.eq.s32.totalorder %s16, 0
      %p99 = por %p97, %p98
      %p100 = scmp.ne.s32.totalorder %s92, %s94
      %p101 = scmp.eq.s32.totalorder %s21, 1
      %p102 = por %p100, %p101
      %p103 = scmp.ne.s32.totalorder %s94, %s95
      %p104 = scmp.eq.s32.totalorder %s21, 0
      %p105 = por %p103, %p104
      %p106 = scmp.ne.s32.totalorder %s94, %s95
      %p107 = scmp.eq.s32.totalorder %s22, 1
      %p108 = por %p106, %p107
      %p110 = scmp.ne.s32.totalorder %s95, %s109
      %p111 = scmp.eq.s32.totalorder %s22, 0
      %p112 = por %p110, %p111
      %s114 = sadd.s32 %s113, 1
      %p117 = scmp.eq.s32.totalorder %s16, 1
      %p118 = scmp.ne.s32.totalorder %s113, %s115
      %p119 = scmp.eq.s32.totalorder %s16, 0
      %p120 = por %p118, %p119
      %p121 = scmp.ne.s32.totalorder %s113, %s115
      %p122 = scmp.eq.s32.totalorder %s21, 1
      %p123 = por %p121, %p122
      %p124 = scmp.ne.s32.totalorder %s115, %s116
      %p125 = scmp.eq.s32.totalorder %s21, 0
      %p126 = por %p124, %p125
      %p127 = scmp.ne.s32.totalorder %s115, %s116
      %p128 = scmp.eq.s32.totalorder %s22, 1
      %p129 = por %p127, %p128
      %p131 = scmp.ne.s32.totalorder %s116, %s130
      %p132 = scmp.eq.s32.totalorder %s22, 0
      %p133 = por %p131, %p132
      %s135 = sadd.s32 %s134, 1
      %p138 = scmp.eq.s32.totalorder %s16, 1
      %p139 = scmp.ne.s32.totalorder %s134, %s136
      %p140 = scmp.eq.s32.totalorder %s16, 0
      %p141 = por %p139, %p140
      %p142 = scmp.ne.s32.totalorder %s134, %s136
      %p143 = scmp.eq.s32.totalorder %s21, 1
      %p144 = por %p142, %p143
      %p145 = scmp.ne.s32.totalorder %s136, %s137
      %p146 = scmp.eq.s32.totalorder %s21, 0
      %p147 = por %p145, %p146
      %p148 = scmp.ne.s32.totalorder %s136, %s137
      %p149 = scmp.eq.s32.totalorder %s22, 1
      %p150 = por %p148, %p149
      %p152 = scmp.ne.s32.totalorder %s137, %s151
      %p153 = scmp.eq.s32.totalorder %s22, 0
      %p154 = por %p152, %p153
      %s156 = sadd.s32 %s155, 1
      %p159 = scmp.eq.s32.totalorder %s16, 1
      %p160 = scmp.ne.s32.totalorder %s155, %s157
      %p161 = scmp.eq.s32.totalorder %s16, 0
      %p162 = por %p160, %p161
      %p163 = scmp.ne.s32.totalorder %s155, %s157
      %p164 = scmp.eq.s32.totalorder %s21, 1
      %p165 = por %p163, %p164
      %p166 = scmp.ne.s32.totalorder %s157, %s158
      %p167 = scmp.eq.s32.totalorder %s21, 0
      %p168 = por %p166, %p167
      %p169 = scmp.ne.s32.totalorder %s157, %s158
      %p170 = scmp.eq.s32.totalorder %s22, 1
      %p171 = por %p169, %p170
      %p173 = scmp.ne.s32.totalorder %s158, %s172
      %p174 = scmp.eq.s32.totalorder %s22, 0
      %p175 = por %p173, %p174
      %s176 = ssub.s32 %s16, %s23
      %p177 = scmp.eq.s32.totalorder %s176, 0
      %s179 = sadd.s32 %s178, 1
      %s180 = scalar_select %p177, %s178, %s179
      %p183 = pneg %p177
      %p184 = scmp.eq.s32.totalorder %s16, 1
      %p185 = por %p183, %p184
      %p186 = scmp.ne.s32.totalorder %s178, %s181
      %p187 = scmp.eq.s32.totalorder %s16, 0
      %p188 = por %p186, %p187
      %p189 = scmp.ne.s32.totalorder %s178, %s181
      %p190 = scmp.eq.s32.totalorder %s21, 1
      %p191 = por %p189, %p190
      %p192 = scmp.ne.s32.totalorder %s181, %s182
      %p193 = scmp.eq.s32.totalorder %s21, 0
      %p194 = por %p192, %p193
      %p195 = scmp.ne.s32.totalorder %s181, %s182
      %p196 = scmp.eq.s32.totalorder %s22, 1
      %p197 = por %p195, %p196
      %p199 = scmp.ne.s32.totalorder %s182, %s198
      %p200 = scmp.eq.s32.totalorder %s22, 0
      %p201 = por %p199, %p200
      %p202 = scmp.le.s32.totalorder 1, %s16
      %p203 = scmp.lt.s32.totalorder %s16, 3
      %p204 = pnand %p202, %p203
      %p205 = pneg %p204
      // Predicated region
      $region9: #{tpu_custom_call.1} parent=5 // pred_check
        _
      $region10: #{tpu_custom_call.1} parent=5 // pred_check_branch
        %207 = sbr.rel (%p204) target = $region12
      $region11: #{tpu_custom_call.1} parent=5 // pred_region
        %s208 = ssub.s32 %s16, 1
        // Predicated region
        $region13: #{tpu_custom_call.1} parent=11 // pred_check
          %p209 = pneg %p63
        $region14: #{tpu_custom_call.1} parent=11 // pred_check_branch
          %211 = sbr.rel (%p209) target = $region16
        $region15: #{tpu_custom_call.1} parent=11 // pred_region
          _
        $region16: #{tpu_custom_call.1} parent=11 // pred_fallthru
          _
        // Predicated region
        $region17: #{tpu_custom_call.1} parent=11 // pred_check
          %p212 = pneg %p84
        $region18: #{tpu_custom_call.1} parent=11 // pred_check_branch
          %214 = sbr.rel (%p212) target = $region20
        $region19: #{tpu_custom_call.1} parent=11 // pred_region
          _
        $region20: #{tpu_custom_call.1} parent=11 // pred_fallthru
          _
        // Predicated region
        $region21: #{tpu_custom_call.1} parent=11 // pred_check
          %p215 = pneg %p105
        $region22: #{tpu_custom_call.1} parent=11 // pred_check_branch
          %217 = sbr.rel (%p215) target = $region24
        $region23: #{tpu_custom_call.1} parent=11 // pred_region
          _
        $region24: #{tpu_custom_call.1} parent=11 // pred_fallthru
          _
        // Predicated region
        $region25: #{tpu_custom_call.1} parent=11 // pred_check
          %p218 = pneg %p126
        $region26: #{tpu_custom_call.1} parent=11 // pred_check_branch
          %220 = sbr.rel (%p218) target = $region28
        $region27: #{tpu_custom_call.1} parent=11 // pred_region
          _
        $region28: #{tpu_custom_call.1} parent=11 // pred_fallthru
          _
        // Predicated region
        $region29: #{tpu_custom_call.1} parent=11 // pred_check
          %p221 = pneg %p147
        $region30: #{tpu_custom_call.1} parent=11 // pred_check_branch
          %223 = sbr.rel (%p221) target = $region32
        $region31: #{tpu_custom_call.1} parent=11 // pred_region
          _
        $region32: #{tpu_custom_call.1} parent=11 // pred_fallthru
          _
        // Predicated region
        $region33: #{tpu_custom_call.1} parent=11 // pred_check
          %p224 = pneg %p168
        $region34: #{tpu_custom_call.1} parent=11 // pred_check_branch
          %226 = sbr.rel (%p224) target = $region36
        $region35: #{tpu_custom_call.1} parent=11 // pred_region
          _
        $region36: #{tpu_custom_call.1} parent=11 // pred_fallthru
          _
      $region12: #{tpu_custom_call.1} parent=5 // pred_fallthru
        _
      %p227 = scmp.lt.s32.totalorder %s16, 2
      // Predicated region
      $region37: #{tpu_custom_call.1} parent=5 // pred_check
        %p228 = pneg %p227
      $region38: #{tpu_custom_call.1} parent=5 // pred_check_branch
        %230 = sbr.rel (%p228) target = $region40
      $region39: #{tpu_custom_call.1} parent=5 // pred_region
        // Predicated region
        $region41: #{tpu_custom_call.1} parent=39 // pred_check
          %p231 = pneg %p36
        $region42: #{tpu_custom_call.1} parent=39 // pred_check_branch
          %233 = sbr.rel (%p231) target = $region44
        $region43: #{tpu_custom_call.1} parent=39 // pred_region
          %s234 = smul.u32 4, %s16
          %p235 = scmp.lt.s32.totalorder %s234, 7
          %s236 = scalar_select %p235, %s234, 7
          %s237 = smul.addr %s236, 8
          %s238 = scalar_lea.vmem %s0, %s237
          %s239 = smul.u32 4, %s16
        $region44: #{tpu_custom_call.1} parent=39 // pred_fallthru
          _
      $region40: #{tpu_custom_call.1} parent=5 // pred_fallthru
        _
      %p240 = scmp.le.s32.totalorder 1, %s16
      %p241 = scmp.lt.s32.totalorder %s16, 3
      %p242 = pnand %p240, %p241
      %p243 = pneg %p242
      // Predicated region
      $region45: #{tpu_custom_call.1} parent=5 // pred_check
        _
      $region46: #{tpu_custom_call.1} parent=5 // pred_check_branch
        %245 = sbr.rel (%p242) target = $region48
      $region47: #{tpu_custom_call.1} parent=5 // pred_region
        %s246 = ssub.s32 %s16, 1
        %s247 = smul.u32 4, %s21
        %p248 = scmp.lt.s32.totalorder %s247, 7
        %s249 = scalar_select %p248, %s247, 7
        %s250 = smul.addr %s249, 8
        %s251 = scalar_lea.vmem %s0, %s250
        %p252 = pneg %p42
        %p253 = pneg %p39
        %p254 = pneg %p63
        %p255 = pneg %p60
        %p256 = pneg %p84
        %p257 = pneg %p81
        %p258 = pneg %p105
        %p259 = pneg %p102
        %p260 = pneg %p126
        %p261 = pneg %p123
        %p262 = pneg %p147
        %p263 = pneg %p144
        %p264 = pneg %p168
        %p265 = pneg %p165
        %p266 = pneg %p194
        %p267 = pneg %p191
        %s268 = sand.u32 %s181, 1
        %s269 = scalar_lea.sflag [#allocation3], %s268
        %s270 = sand.u32 %s181, 1
        %s271 = smul.addr %s270, 32
        %s272 = scalar_lea.vmem [#allocation2], %s271
        %s273 = smul.u32 4, %s21
        %p274 = scmp.lt.s32.totalorder %s273, 7
        %s275 = scalar_select %p274, %s273, 7
        %s276 = smul.addr %s275, 8
        %s277 = scalar_lea.vmem %s0, %s276
        %s278 = smul.u32 4, %s21
        %s279 = smul.u32 4, %s21
        %v280 = vld [vmem:[%s277] sm:$0xff]
        %v281 = vld [vmem:[%s277 + $0x8] sm:$0xff]
        %v282 = vld [vmem:[%s277 + $0x10] sm:$0xff]
        %v283 = vld [vmem:[%s277 + $0x18] sm:$0xff]
        %v284 = vld [vmem:[%s1] sm:$0xff]
        %v285 = vld [vmem:[%s1 + $0x8] sm:$0xff]
        %v286 = vld [vmem:[%s2] sm:$0x1]
        %v288 = vlaneseq
        %v289 = vshrl.u32 %v288, 7
        %v290 = vsub.s32 0, %v289
        %v291 = vrot.slane %v286, %v290
        %vm293 = vcmask 130048
        %v295 = vsel %vm293, %v280, 0
        %v298 = vsel %vm293, %v281, 0
        %v301 = vsel %vm293, %v282, 0
        %v304 = vsel %vm293, %v283, 0
        %306 = vmatprep.subr.mxu0 0.0
        %307 = vmatpush1.msra.mxu0 0.0
        %308 = vmatprep.subr.mxu0 0.0
        %309 = vmatpush1.msra.mxu0 0.0
        %310 = vmatprep.subr.mxu0 0.0
        %311 = vmatpush1.msra.mxu0 0.0
        %312 = vmatprep.subr.mxu0 0.0
        %313 = vmatpush1.msra.mxu0 0.0
        %314 = vmatprep.subr.mxu0 0.0
        %315 = vmatpush1.msra.mxu0 0.0
        %316 = vmatprep.subr.mxu0 0.0
        %317 = vmatpush1.msra.mxu0 0.0
        %318 = vmatprep.subr.mxu0 0.0
        %319 = vmatpush1.msra.mxu0 0.0
        %320 = vmatprep.subr.mxu0 0.0
        %321 = vmatpush1.msra.mxu0 0.0
        %322 = vmatprep.subr.mxu0 0.0
        %323 = vmatpush1.msra.mxu0 0.0
        %324 = vmatprep.subr.mxu0 0.0
        %325 = vmatpush1.msra.mxu0 0.0
        %326 = vmatprep.subr.mxu0 0.0
        %327 = vmatpush1.msra.mxu0 0.0
        %328 = vmatprep.subr.mxu0 0.0
        %329 = vmatpush1.msra.mxu0 0.0
        %330 = vmatprep.subr.mxu0 0.0
        %331 = vmatpush1.msra.mxu0 0.0
        %332 = vmatprep.subr.mxu0 0.0
        %333 = vmatpush1.msra.mxu0 0.0
        %334 = vmatprep.subr.mxu0 0.0
        %335 = vmatpush1.msra.mxu0 %v285
        %336 = vmatprep.subr.mxu0 0.0
        %337 = vmatpush1.msra.mxu0 %v284
        %338 = vmatprep.subr.mxu0 0.0
        %339 = vmatpush2.msra.mxu0 0.0
        %340 = vmatprep.subr.mxu0 0.0
        %341 = vmatpush2.msra.mxu0 0.0
        %342 = vmatprep.subr.mxu0 0.0
        %343 = vmatpush2.msra.mxu0 0.0
        %344 = vmatprep.subr.mxu0 0.0
        %345 = vmatpush2.msra.mxu0 0.0
        %346 = vmatprep.subr.mxu0 0.0
        %347 = vmatpush2.msra.mxu0 0.0
        %348 = vmatprep.subr.mxu0 0.0
        %349 = vmatpush2.msra.mxu0 0.0
        %350 = vmatprep.subr.mxu0 0.0
        %351 = vmatpush2.msra.mxu0 0.0
        %352 = vmatprep.subr.mxu0 0.0
        %353 = vmatpush2.msra.mxu0 0.0
        %354 = vmatprep.subr.mxu0 0.0
        %355 = vmatpush2.msra.mxu0 0.0
        %356 = vmatprep.subr.mxu0 0.0
        %357 = vmatpush2.msra.mxu0 0.0
        %358 = vmatprep.subr.mxu0 0.0
        %359 = vmatpush2.msra.mxu0 0.0
        %360 = vmatprep.subr.mxu0 0.0
        %361 = vmatpush2.msra.mxu0 0.0
        %362 = vmatprep.subr.mxu0 0.0
        %363 = vmatpush2.msra.mxu0 0.0
        %364 = vmatprep.subr.mxu0 0.0
        %365 = vmatpush2.msra.mxu0 0.0
        %366 = vmatprep.subr.mxu0 0.0
        %367 = vmatpush2.msra.mxu0 0.0
        %368 = vmatprep.subr.mxu0 0.0
        %369 = vmatpush2.msra.mxu0 0.0
        %370 = vmatprep.mubr.f32.mxu0 0.0
        %371 = vmatmul.mubr.f32.gmra.mxu0 %v295
        %v372 = vpop.f32.mrf.mxu0
        %v373 = vadd.f32 %v291, %v372
        %v374 = vpop.f32.mrf.mxu0
        %375 = vmatprep.mubr.f32.mxu0 0.0
        %376 = vmatmul.mubr.f32.gmra.mxu0 %v298
        %v377 = vpop.f32.mrf.mxu0
        %v378 = vadd.f32 %v291, %v377
        %v379 = vpop.f32.mrf.mxu0
        %380 = vmatprep.mubr.f32.mxu0 0.0
        %381 = vmatmul.mubr.f32.gmra.mxu0 %v301
        %v382 = vpop.f32.mrf.mxu0
        %v383 = vadd.f32 %v291, %v382
        %v384 = vpop.f32.mrf.mxu0
        %385 = vmatprep.mubr.f32.mxu0 0.0
        %386 = vmatmul.mubr.f32.gmra.mxu0 %v304
        %v387 = vpop.f32.mrf.mxu0
        %v388 = vadd.f32 %v291, %v387
        %v389 = vpop.f32.mrf.mxu0
        %390 = vdwg.mxu0
        %v391 = vmax.f32 %v373, 0.0
        %v392 = vmax.f32 %v378, 0.0
        %v393 = vmax.f32 %v383, 0.0
        %v394 = vmax.f32 %v388, 0.0
        %v395 = vld [vmem:[%s3] sm:$0xff]
        %v396 = vld [vmem:[%s3 + $0x8] sm:$0xff]
        %v397 = vld [vmem:[%s3 + $0x10] sm:$0xff]
        %v398 = vld [vmem:[%s3 + $0x18] sm:$0xff]
        %v399 = vld [vmem:[%s4] sm:$0x1]
        %v401 = vlaneseq
        %v402 = vshrl.u32 %v401, 7
        %v403 = vsub.s32 0, %v402
        %v404 = vrot.slane %v399, %v403
        %vm406 = vcmask 261120
        %v408 = vsel %vm406, %v391, 0
        %v411 = vsel %vm406, %v392, 0
        %v414 = vsel %vm406, %v393, 0
        %v417 = vsel %vm406, %v394, 0
        %419 = vmatprep.subr.mxu0 0.0
        %420 = vmatpush1.msra.mxu0 0.0
        %421 = vmatprep.subr.mxu0 0.0
        %422 = vmatpush1.msra.mxu0 0.0
        %423 = vmatprep.subr.mxu0 0.0
        %424 = vmatpush1.msra.mxu0 0.0
        %425 = vmatprep.subr.mxu0 0.0
        %426 = vmatpush1.msra.mxu0 0.0
        %427 = vmatprep.subr.mxu0 0.0
        %428 = vmatpush1.msra.mxu0 0.0
        %429 = vmatprep.subr.mxu0 0.0
        %430 = vmatpush1.msra.mxu0 0.0
        %431 = vmatprep.subr.mxu0 0.0
        %432 = vmatpush1.msra.mxu0 0.0
        %433 = vmatprep.subr.mxu0 0.0
        %434 = vmatpush1.msra.mxu0 0.0
        %435 = vmatprep.subr.mxu0 0.0
        %436 = vmatpush1.msra.mxu0 0.0
        %437 = vmatprep.subr.mxu0 0.0
        %438 = vmatpush1.msra.mxu0 0.0
        %439 = vmatprep.subr.mxu0 0.0
        %440 = vmatpush1.msra.mxu0 0.0
        %441 = vmatprep.subr.mxu0 0.0
        %442 = vmatpush1.msra.mxu0 0.0
        %443 = vmatprep.subr.mxu0 0.0
        %444 = vmatpush1.msra.mxu0 %v398
        %445 = vmatprep.subr.mxu0 0.0
        %446 = vmatpush1.msra.mxu0 %v397
        %447 = vmatprep.subr.mxu0 0.0
        %448 = vmatpush1.msra.mxu0 %v396
        %449 = vmatprep.subr.mxu0 0.0
        %450 = vmatpush1.msra.mxu0 %v395
        %451 = vmatprep.subr.mxu0 0.0
        %452 = vmatpush2.msra.mxu0 0.0
        %453 = vmatprep.subr.mxu0 0.0
        %454 = vmatpush2.msra.mxu0 0.0
        %455 = vmatprep.subr.mxu0 0.0
        %456 = vmatpush2.msra.mxu0 0.0
        %457 = vmatprep.subr.mxu0 0.0
        %458 = vmatpush2.msra.mxu0 0.0
        %459 = vmatprep.subr.mxu0 0.0
        %460 = vmatpush2.msra.mxu0 0.0
        %461 = vmatprep.subr.mxu0 0.0
        %462 = vmatpush2.msra.mxu0 0.0
        %463 = vmatprep.subr.mxu0 0.0
        %464 = vmatpush2.msra.mxu0 0.0
        %465 = vmatprep.subr.mxu0 0.0
        %466 = vmatpush2.msra.mxu0 0.0
        %467 = vmatprep.subr.mxu0 0.0
        %468 = vmatpush2.msra.mxu0 0.0
        %469 = vmatprep.subr.mxu0 0.0
        %470 = vmatpush2.msra.mxu0 0.0
        %471 = vmatprep.subr.mxu0 0.0
        %472 = vmatpush2.msra.mxu0 0.0
        %473 = vmatprep.subr.mxu0 0.0
        %474 = vmatpush2.msra.mxu0 0.0
        %475 = vmatprep.subr.mxu0 0.0
        %476 = vmatpush2.msra.mxu0 0.0
        %477 = vmatprep.subr.mxu0 0.0
        %478 = vmatpush2.msra.mxu0 0.0
        %479 = vmatprep.subr.mxu0 0.0
        %480 = vmatpush2.msra.mxu0 0.0
        %481 = vmatprep.subr.mxu0 0.0
        %482 = vmatpush2.msra.mxu0 0.0
        %483 = vmatprep.mubr.f32.mxu0 0.0
        %484 = vmatmul.mubr.f32.gmra.mxu0 %v408
        %v485 = vpop.f32.mrf.mxu0
        %v486 = vadd.f32 %v404, %v485
        %v487 = vpop.f32.mrf.mxu0
        %488 = vmatprep.mubr.f32.mxu0 0.0
        %489 = vmatmul.mubr.f32.gmra.mxu0 %v411
        %v490 = vpop.f32.mrf.mxu0
        %v491 = vadd.f32 %v404, %v490
        %v492 = vpop.f32.mrf.mxu0
        %493 = vmatprep.mubr.f32.mxu0 0.0
        %494 = vmatmul.mubr.f32.gmra.mxu0 %v414
        %v495 = vpop.f32.mrf.mxu0
        %v496 = vadd.f32 %v404, %v495
        %v497 = vpop.f32.mrf.mxu0
        %498 = vmatprep.mubr.f32.mxu0 0.0
        %499 = vmatmul.mubr.f32.gmra.mxu0 %v417
        %v500 = vpop.f32.mrf.mxu0
        %v501 = vadd.f32 %v404, %v500
        %v502 = vpop.f32.mrf.mxu0
        %503 = vdwg.mxu0
        %v504 = vmax.f32 %v486, 0.0
        %v505 = vmax.f32 %v491, 0.0
        %v506 = vmax.f32 %v496, 0.0
        %v507 = vmax.f32 %v501, 0.0
        %v508 = vld [vmem:[%s5] sm:$0xff]
        %v509 = vld [vmem:[%s5 + $0x8] sm:$0xff]
        %v510 = vld [vmem:[%s5 + $0x10] sm:$0xff]
        %v511 = vld [vmem:[%s5 + $0x18] sm:$0xff]
        %v512 = vld [vmem:[%s6] sm:$0x1]
        %v514 = vlaneseq
        %v515 = vshrl.u32 %v514, 7
        %v516 = vsub.s32 0, %v515
        %v517 = vrot.slane %v512, %v516
        %v520 = vsel %vm406, %v504, 0
        %v523 = vsel %vm406, %v505, 0
        %v526 = vsel %vm406, %v506, 0
        %v529 = vsel %vm406, %v507, 0
        %531 = vmatprep.subr.mxu0 0.0
        %532 = vmatpush1.msra.mxu0 0.0
        %533 = vmatprep.subr.mxu0 0.0
        %534 = vmatpush1.msra.mxu0 0.0
        %535 = vmatprep.subr.mxu0 0.0
        %536 = vmatpush1.msra.mxu0 0.0
        %537 = vmatprep.subr.mxu0 0.0
        %538 = vmatpush1.msra.mxu0 0.0
        %539 = vmatprep.subr.mxu0 0.0
        %540 = vmatpush1.msra.mxu0 0.0
        %541 = vmatprep.subr.mxu0 0.0
        %542 = vmatpush1.msra.mxu0 0.0
        %543 = vmatprep.subr.mxu0 0.0
        %544 = vmatpush1.msra.mxu0 0.0
        %545 = vmatprep.subr.mxu0 0.0
        %546 = vmatpush1.msra.mxu0 0.0
        %547 = vmatprep.subr.mxu0 0.0
        %548 = vmatpush1.msra.mxu0 0.0
        %549 = vmatprep.subr.mxu0 0.0
        %550 = vmatpush1.msra.mxu0 0.0
        %551 = vmatprep.subr.mxu0 0.0
        %552 = vmatpush1.msra.mxu0 0.0
        %553 = vmatprep.subr.mxu0 0.0
        %554 = vmatpush1.msra.mxu0 0.0
        %555 = vmatprep.subr.mxu0 0.0
        %556 = vmatpush1.msra.mxu0 %v511
        %557 = vmatprep.subr.mxu0 0.0
        %558 = vmatpush1.msra.mxu0 %v510
        %559 = vmatprep.subr.mxu0 0.0
        %560 = vmatpush1.msra.mxu0 %v509
        %561 = vmatprep.subr.mxu0 0.0
        %562 = vmatpush1.msra.mxu0 %v508
        %563 = vmatprep.subr.mxu0 0.0
        %564 = vmatpush2.msra.mxu0 0.0
        %565 = vmatprep.subr.mxu0 0.0
        %566 = vmatpush2.msra.mxu0 0.0
        %567 = vmatprep.subr.mxu0 0.0
        %568 = vmatpush2.msra.mxu0 0.0
        %569 = vmatprep.subr.mxu0 0.0
        %570 = vmatpush2.msra.mxu0 0.0
        %571 = vmatprep.subr.mxu0 0.0
        %572 = vmatpush2.msra.mxu0 0.0
        %573 = vmatprep.subr.mxu0 0.0
        %574 = vmatpush2.msra.mxu0 0.0
        %575 = vmatprep.subr.mxu0 0.0
        %576 = vmatpush2.msra.mxu0 0.0
        %577 = vmatprep.subr.mxu0 0.0
        %578 = vmatpush2.msra.mxu0 0.0
        %579 = vmatprep.subr.mxu0 0.0
        %580 = vmatpush2.msra.mxu0 0.0
        %581 = vmatprep.subr.mxu0 0.0
        %582 = vmatpush2.msra.mxu0 0.0
        %583 = vmatprep.subr.mxu0 0.0
        %584 = vmatpush2.msra.mxu0 0.0
        %585 = vmatprep.subr.mxu0 0.0
        %586 = vmatpush2.msra.mxu0 0.0
        %587 = vmatprep.subr.mxu0 0.0
        %588 = vmatpush2.msra.mxu0 0.0
        %589 = vmatprep.subr.mxu0 0.0
        %590 = vmatpush2.msra.mxu0 0.0
        %591 = vmatprep.subr.mxu0 0.0
        %592 = vmatpush2.msra.mxu0 0.0
        %593 = vmatprep.subr.mxu0 0.0
        %594 = vmatpush2.msra.mxu0 0.0
        %595 = vmatprep.mubr.f32.mxu0 0.0
        %596 = vmatmul.mubr.f32.gmra.mxu0 %v520
        %v597 = vpop.f32.mrf.mxu0
        %v598 = vadd.f32 %v517, %v597
        %v599 = vpop.f32.mrf.mxu0
        %600 = vmatprep.mubr.f32.mxu0 0.0
        %601 = vmatmul.mubr.f32.gmra.mxu0 %v523
        %v602 = vpop.f32.mrf.mxu0
        %v603 = vadd.f32 %v517, %v602
        %v604 = vpop.f32.mrf.mxu0
        %605 = vmatprep.mubr.f32.mxu0 0.0
        %606 = vmatmul.mubr.f32.gmra.mxu0 %v526
        %v607 = vpop.f32.mrf.mxu0
        %v608 = vadd.f32 %v517, %v607
        %v609 = vpop.f32.mrf.mxu0
        %610 = vmatprep.mubr.f32.mxu0 0.0
        %611 = vmatmul.mubr.f32.gmra.mxu0 %v529
        %v612 = vpop.f32.mrf.mxu0
        %v613 = vadd.f32 %v517, %v612
        %v614 = vpop.f32.mrf.mxu0
        %615 = vdwg.mxu0
        %616 = vst [vmem:[%s272] sm:$0xff] %v598
        %617 = vst [vmem:[%s272 + $0x8] sm:$0xff] %v603
        %618 = vst [vmem:[%s272 + $0x10] sm:$0xff] %v608
        %619 = vst [vmem:[%s272 + $0x18] sm:$0xff] %v613
        %s620 = sand.u32 %s181, 1
        %s621 = scalar_lea.sflag [#allocation3], %s620
        %s622 = sand.u32 %s181, 1
        %s623 = smul.addr %s622, 32
        %s624 = scalar_lea.vmem [#allocation2], %s623
        // Predicated region
        $region49: #{tpu_custom_call.1} parent=47 // pred_check
          %p625 = pneg %p191
        $region50: #{tpu_custom_call.1} parent=47 // pred_check_branch
          %627 = sbr.rel (%p625) target = $region52
        $region51: #{tpu_custom_call.1} parent=47 // pred_region
          %s628 = smul.u32 4, %s21
          %s630 = ssub.s32 512, 512
          %631 = vsyncadd %s621, %s630
          %s632 = smul.addr %s628, 128
          %s633 = scalar_lea.hbm %s7, %s632
          %s634 = sshll.u32 %s624, 4
          %s635 = int_to_ptr.vmem [resolvable:$true] %s634
          %640 = dma.vmem_to_hbm [thread:$0]  %s635, 512, %s633, %s621, 128, 128, 8
        $region52: #{tpu_custom_call.1} parent=47 // pred_fallthru
          _
      $region48: #{tpu_custom_call.1} parent=5 // pred_fallthru
        _
      %p641 = scmp.le.s32.totalorder 2, %s16
      // Predicated region
      $region53: #{tpu_custom_call.1} parent=5 // pred_check
        %p642 = pneg %p641
      $region54: #{tpu_custom_call.1} parent=5 // pred_check_branch
        %644 = sbr.rel (%p642) target = $region56
      $region55: #{tpu_custom_call.1} parent=5 // pred_region
        %s645 = ssub.s32 %s16, 2
        // Predicated region
        $region57: #{tpu_custom_call.1} parent=55 // pred_check
          %p646 = pneg %p197
        $region58: #{tpu_custom_call.1} parent=55 // pred_check_branch
          %648 = sbr.rel (%p646) target = $region60
        $region59: #{tpu_custom_call.1} parent=55 // pred_region
          %s649 = sand.u32 %s182, 1
          %s650 = scalar_lea.sflag [#allocation3], %s649
          %s651 = sand.u32 %s182, 1
          %s652 = smul.addr %s651, 32
          %s653 = scalar_lea.vmem [#allocation2], %s652
          %654 = dma.done %s650, 512
        $region60: #{tpu_custom_call.1} parent=55 // pred_fallthru
          _
      $region56: #{tpu_custom_call.1} parent=5 // pred_fallthru
        _
    $region6: #{tpu_custom_call.1} parent=1 // loop_footer
      %s20 = sadd.s32 1, %s16
    $region7: #{tpu_custom_call.1} parent=1 // loop_footer_branch
      %15 = sbr.rel target = $region3
    $region8: #{tpu_custom_call.1} parent=1 // loop_exit
      _
    %655 = vsyncpa [#allocation3], 1
    %s656 = scalar_lea.sflag [#allocation3], 1
    %657 = vsyncpa %s656, 1

</llo_original>
